<compile_context>
chip_gen: v7x
topology: tpu7x:2x2x1
jax: 0.10.0
libtpu: 0.0.40
codegen_flags: <defaults>
</compile_context>

<pallas_src>
import functools

import jax
import jax.numpy as jnp
from jax.experimental import pallas as pl
from jax.experimental.pallas import tpu as pltpu

_LANE = 128


def im_layer_kernel(x0_ref, x1_ref, w0_ref, w1_ref, b_ref, out_ref):
    # Two accumulating MXU dots against the two packed weight halves; bf16
    # operands, f32 accumulation; bias folded into the epilogue add.
    x0 = x0_ref[...].astype(jnp.bfloat16)
    x1 = x1_ref[...].astype(jnp.bfloat16)
    pre = jnp.dot(x0, w0_ref[...], preferred_element_type=jnp.float32)
    pre = pre + jnp.dot(x1, w1_ref[...], preferred_element_type=jnp.float32)
    pre = pre + b_ref[...]                       # (tb, O_pad) + (1, O_pad)
    out_ref[...] = jax.nn.sigmoid(pre)           # EUP logistic, numerically stable


def pack_im_layer_params(w0_masked, w1_masked, b0, b1, *, weight_dtype=jnp.bfloat16):
    """One-time (module-init) packing.

    Transposes each masked (O, in_i) weight to (in_i, O_pad) with the output
    lane dim zero-padded to a multiple of 128, casts weights to bf16, and
    pre-sums the biases into a single f32 (1, O_pad) row.  Done once at init so
    the per-call forward has zero transpose / pad / cast glue ops.
    """
    O = w0_masked.shape[0]
    O_pad = ((O + _LANE - 1) // _LANE) * _LANE

    def pad_w(w):
        wt = jnp.asarray(w, jnp.float32).T                       # (in_i, O)
        wt = jnp.pad(wt, ((0, 0), (0, O_pad - O)))               # (in_i, O_pad)
        return wt.astype(weight_dtype)

    w0_packed = pad_w(w0_masked)
    w1_packed = pad_w(w1_masked)
    b = jnp.asarray(b0, jnp.float32) + jnp.asarray(b1, jnp.float32)
    b_packed = jnp.pad(b, (0, O_pad - O)).reshape(1, O_pad).astype(jnp.float32)
    return w0_packed, w1_packed, b_packed


def _choose_batch_tile(B, block_b):
    """Multiple-of-8 batch tile dividing B; prefer >= 2 grid steps (v7x megacore)."""
    if B % 8 != 0 or B < 16:
        return B                              # single whole-batch tile
    cap = min(block_b, B // 2)                # >= 2 grid steps when possible
    tb = (cap // 8) * 8
    while tb >= 8 and B % tb != 0:
        tb -= 8
    return tb if tb >= 8 else B


def im_layer_forward(x0, x1, w0_packed, w1_packed, b_packed, output_size, *,
                     block_b=512):
    """IM_Layer forward: returns `out` of shape (B, output_size) in f32."""
    B, K0 = x0.shape
    B1, K1 = x1.shape
    assert B == B1
    O_pad = w0_packed.shape[1]
    assert w0_packed.shape[0] == K0 and w1_packed.shape == (K1, O_pad)
    assert b_packed.shape == (1, O_pad)

    tb = _choose_batch_tile(B, block_b)
    grid = (pl.cdiv(B, tb),)

    # VMEM footprint (double-buffered x/out tiles + resident weights/bias).
    xbytes = x0.dtype.itemsize
    wbytes = w0_packed.dtype.itemsize
    footprint = (2 * tb * (K0 + K1) * xbytes
                 + 2 * (K0 + K1) * O_pad * wbytes
                 + 2 * O_pad * 4
                 + 2 * tb * O_pad * 4)
    vmem_limit = None
    if footprint > 12 * 1024 * 1024:          # only override when actually needed
        vmem_limit = min(int(1.5 * footprint) + (1 << 20), 64 * 1024 * 1024)

    cost = pl.CostEstimate(
        flops=2 * B * (K0 + K1) * O_pad,
        transcendentals=B * O_pad,
        bytes_accessed=(B * (K0 + K1) * xbytes
                        + (K0 + K1) * O_pad * wbytes
                        + O_pad * 4
                        + B * O_pad * 4),
    )

    out_pad = pl.pallas_call(
        im_layer_kernel,
        out_shape=jax.ShapeDtypeStruct((B, O_pad), jnp.float32),
        grid=grid,
        in_specs=[
            pl.BlockSpec((tb, K0), lambda i: (i, 0)),     # x0 tile (pipelined)
            pl.BlockSpec((tb, K1), lambda i: (i, 0)),     # x1 tile (pipelined)
            pl.BlockSpec((K0, O_pad), lambda i: (0, 0)),  # resident bf16 weight 0
            pl.BlockSpec((K1, O_pad), lambda i: (0, 0)),  # resident bf16 weight 1
            pl.BlockSpec((1, O_pad), lambda i: (0, 0)),   # resident fused bias
        ],
        out_specs=pl.BlockSpec((tb, O_pad), lambda i: (i, 0)),
        compiler_params=pltpu.CompilerParams(
            dimension_semantics=("parallel",),
            vmem_limit_bytes=vmem_limit,
        ),
        cost_estimate=cost,
    )(x0, x1, w0_packed, w1_packed, b_packed)

    if O_pad != output_size:
        out_pad = out_pad[:, :output_size]    # drop zero-pad lanes (cheap slice)
    return out_pad


def im_layer_out_probs(out):
    """save_for_loss tensor, computed at loss time (fuses into the loss)."""
    return jnp.stack([out, 1.0 - out], axis=2)    # (B, O, 2), torch semantics


def _connection_mask(c, output_size, input_size):
    """Replicates IM_Layer.init_connections weight masking."""
    if isinstance(c, int) and c == 1:
        return jnp.ones((output_size, input_size), jnp.float32)
    if isinstance(c, int) and c == 0:
        return jnp.zeros((output_size, input_size), jnp.float32)
    c = jnp.asarray(c, jnp.float32)
    assert c.shape == (output_size, input_size)
    return c


if __name__ == "__main__":
    # Small shapes consistent with the module: 2 sources, 2-D inputs (batch, feat)
    B = 8
    input_sizes = [16, 8]
    output_size = 32
    connections = [1, 1]
    bias_flags = [True, True]

    key = jax.random.PRNGKey(0)
    k_w0, k_b0, k_w1, k_b1, k_x0, k_x1 = jax.random.split(key, 6)

    # nn.Linear-style deterministic init: U(-1/sqrt(fan_in), 1/sqrt(fan_in))
    def linear_init(kw, kb, in_size, use_bias):
        bound = 1.0 / jnp.sqrt(jnp.float32(in_size))
        w = jax.random.uniform(kw, (output_size, in_size), jnp.float32, -bound, bound)
        b = (jax.random.uniform(kb, (output_size,), jnp.float32, -bound, bound)
             if use_bias else jnp.zeros((output_size,), jnp.float32))
        return w, b

    w0, b0 = linear_init(k_w0, k_b0, input_sizes[0], bias_flags[0])
    w1, b1 = linear_init(k_w1, k_b1, input_sizes[1], bias_flags[1])

    # init_connections: weight <- weight * connection_mask (done once at init)
    w0 = w0 * _connection_mask(connections[0], output_size, input_sizes[0])
    w1 = w1 * _connection_mask(connections[1], output_size, input_sizes[1])

    # One-time packing (module init), not per-forward.
    w0_packed, w1_packed, b_packed = pack_im_layer_params(w0, w1, b0, b1)

    x0 = jax.random.normal(k_x0, (B, input_sizes[0]), jnp.float32)
    x1 = jax.random.normal(k_x1, (B, input_sizes[1]), jnp.float32)

    fwd = jax.jit(functools.partial(im_layer_forward, output_size=output_size))
    out = fwd(x0, x1, w0_packed, w1_packed, b_packed)
    out = jax.block_until_ready(out)

    # pure-JAX f32 reference (torch semantics)
    v0_ref = x0 @ w0.T + b0
    v1_ref = x1 @ w1.T + b1
    out_ref = jax.nn.sigmoid(v0_ref + v1_ref)
    probs_ref_torch = jnp.stack([out_ref, 1.0 - out_ref], axis=2)  # (B, O, 2)

    assert out.shape == (B, output_size)
    # bf16 MXU operands vs f32 reference: small K, sigmoid-bounded -> ~1e-3 error.
    assert jnp.allclose(out, out_ref, atol=1e-2, rtol=1e-2), \
        float(jnp.max(jnp.abs(out - out_ref)))

    # save_for_loss tensor computed at loss time (outside the kernel).
    out_probs = im_layer_out_probs(out)
    assert out_probs.shape == (B, output_size, 2)
    assert jnp.allclose(out_probs, probs_ref_torch, atol=1e-2, rtol=1e-2)

    print("KERNEL_OK")
</pallas_src>

<mosaic_0001>
module attributes {stable_mosaic.version = 11 : i64} {
  func.func @im_layer_kernel(%arg0: i32, %arg1: memref<8x16xf32, #tpu.memory_space<vmem>>, %arg2: memref<8x8xf32, #tpu.memory_space<vmem>>, %arg3: memref<16x128xbf16, #tpu.memory_space<vmem>>, %arg4: memref<8x128xbf16, #tpu.memory_space<vmem>>, %arg5: memref<1x128xf32, #tpu.memory_space<vmem>>, %arg6: memref<8x128xf32, #tpu.memory_space<vmem>>) attributes {dimension_semantics = [#tpu.dimension_semantics<parallel>], iteration_bounds = array<i64: 1>, scalar_prefetch = 0 : i64, scratch_operands = 0 : i64, tpu.core_type = #tpu.core_type<tc>, window_params = [{transform_indices = @transform_0, window_bounds = array<i64: 8, 16>}, {transform_indices = @transform_1, window_bounds = array<i64: 8, 8>}, {pipeline_mode = #tpu.pipeline_mode<synchronous>, transform_indices = @transform_2, window_bounds = array<i64: 16, 128>}, {pipeline_mode = #tpu.pipeline_mode<synchronous>, transform_indices = @transform_3, window_bounds = array<i64: 8, 128>}, {pipeline_mode = #tpu.pipeline_mode<synchronous>, transform_indices = @transform_4, window_bounds = array<i64: 1, 128>}, {transform_indices = @transform_5, window_bounds = array<i64: 8, 128>}]} {
    %c0 = arith.constant 0 : index
    %c0_0 = arith.constant 0 : index
    %0 = vector.load %arg1[%c0, %c0_0] : memref<8x16xf32, #tpu.memory_space<vmem>>, vector<8x16xf32>
    %1 = arith.truncf %0 : vector<8x16xf32> to vector<8x16xbf16>
    %c0_1 = arith.constant 0 : index
    %c0_2 = arith.constant 0 : index
    %2 = vector.load %arg2[%c0_1, %c0_2] : memref<8x8xf32, #tpu.memory_space<vmem>>, vector<8x8xf32>
    %3 = arith.truncf %2 : vector<8x8xf32> to vector<8x8xbf16>
    %c0_3 = arith.constant 0 : index
    %c0_4 = arith.constant 0 : index
    %4 = vector.load %arg3[%c0_3, %c0_4] : memref<16x128xbf16, #tpu.memory_space<vmem>>, vector<16x128xbf16>
    %cst = arith.constant dense<0.000000e+00> : vector<8x128xf32>
    %5 = tpu.matmul %1, %4, %cst {dimension_numbers = #tpu.dot_dimension_numbers<[1], [0], [0], [1], [0, 0, 1, 1], [], []>} : vector<8x16xbf16>, vector<16x128xbf16>, vector<8x128xf32> -> vector<8x128xf32>
    %c0_5 = arith.constant 0 : index
    %c0_6 = arith.constant 0 : index
    %6 = vector.load %arg4[%c0_5, %c0_6] : memref<8x128xbf16, #tpu.memory_space<vmem>>, vector<8x128xbf16>
    %cst_7 = arith.constant dense<0.000000e+00> : vector<8x128xf32>
    %7 = tpu.matmul %3, %6, %cst_7 {dimension_numbers = #tpu.dot_dimension_numbers<[1], [0], [0], [1], [0, 0, 1, 1], [], []>} : vector<8x8xbf16>, vector<8x128xbf16>, vector<8x128xf32> -> vector<8x128xf32>
    %8 = arith.addf %5, %7 : vector<8x128xf32>
    %c0_8 = arith.constant 0 : index
    %c0_9 = arith.constant 0 : index
    %9 = vector.load %arg5[%c0_8, %c0_9] : memref<1x128xf32, #tpu.memory_space<vmem>>, vector<1x128xf32>
    %10 = vector.broadcast %9 : vector<1x128xf32> to vector<8x128xf32>
    %11 = arith.addf %8, %10 : vector<8x128xf32>
    %12 = arith.negf %11 : vector<8x128xf32>
    %13 = math.exp %12 : vector<8x128xf32>
    %cst_10 = arith.constant 1.000000e+00 : f32
    %14 = vector.broadcast %cst_10 : f32 to vector<8x128xf32>
    %15 = arith.addf %14, %13 : vector<8x128xf32>
    %16 = arith.divf %14, %15 : vector<8x128xf32>
    %c0_11 = arith.constant 0 : index
    %c0_12 = arith.constant 0 : index
    %17 = vector.load %arg6[%c0_11, %c0_12] : memref<8x128xf32, #tpu.memory_space<vmem>>, vector<8x128xf32>
    tpu.vector_store %arg6[%c0_11, %c0_12], %16 {strides = array<i32>} : memref<8x128xf32, #tpu.memory_space<vmem>>, vector<8x128xf32>,
    return
  }
  func.func @transform_0(%arg0: i32) -> (i32, i32) {
    %c0_i32 = arith.constant 0 : i32
    %c0_i32_0 = arith.constant 0 : i32
    return %arg0, %c0_i32 : i32, i32
  }
  func.func @transform_1(%arg0: i32) -> (i32, i32) {
    %c0_i32 = arith.constant 0 : i32
    %c0_i32_0 = arith.constant 0 : i32
    return %arg0, %c0_i32 : i32, i32
  }
  func.func @transform_2(%arg0: i32) -> (i32, i32) {
    %c0_i32 = arith.constant 0 : i32
    %c0_i32_0 = arith.constant 0 : i32
    %c0_i32_1 = arith.constant 0 : i32
    return %c0_i32, %c0_i32_0 : i32, i32
  }
  func.func @transform_3(%arg0: i32) -> (i32, i32) {
    %c0_i32 = arith.constant 0 : i32
    %c0_i32_0 = arith.constant 0 : i32
    %c0_i32_1 = arith.constant 0 : i32
    return %c0_i32, %c0_i32_0 : i32, i32
  }
  func.func @transform_4(%arg0: i32) -> (i32, i32) {
    %c0_i32 = arith.constant 0 : i32
    %c0_i32_0 = arith.constant 0 : i32
    %c0_i32_1 = arith.constant 0 : i32
    return %c0_i32, %c0_i32_0 : i32, i32
  }
  func.func @transform_5(%arg0: i32) -> (i32, i32) {
    %c0_i32 = arith.constant 0 : i32
    %c0_i32_0 = arith.constant 0 : i32
    return %arg0, %c0_i32 : i32, i32
  }
}

</mosaic_0001>

<llo_original>
// kernel: im_layer_forward.1
$region0: #{im_layer_forward.1}
  #allocation0 [shape = 'u32[]', space=smem, size = 0x4, offset = 0x4, fixed_abs, tag = 'smem constant byte address 0x4 - core index']
  #allocation1 [shape = 'u32[144,128]{1,0:T(1,128)}', space=vmem, size = 0x12000, scoped, tag = 'internal scratch']
  %s0 = inlined_call_operand.hbm [shape: f32[8,16], index: 0, kind: input, shape index: {}]
  %s1 = inlined_call_operand.hbm [shape: f32[8,8], index: 1, kind: input, shape index: {}]
  %s2 = inlined_call_operand.hbm [shape: bf16[16,128], index: 2, kind: input, shape index: {}]
  %s3 = inlined_call_operand.vmem [shape: bf16[8,128], index: 3, kind: input, shape index: {}]
  %s4 = inlined_call_operand.vmem [shape: f32[1,128], index: 4, kind: input, shape index: {}]
  %s5 = inlined_call_operand.hbm [shape: f32[8,128], index: 5, kind: output, shape index: {}]
  %s6 = sld [smem:[#allocation0]]
  $region42: #{im_layer_forward.1} parent=0
    _
  %s8 = ssub.s32 1, %s6
  %s9 = scalar_select 0, %s8, %s6
  $region1: #{im_layer_forward.1} parent=0
    #allocation2 [shape = 'u8[4096]{0}', space=vmem, size = 0x1000, scoped, tag = 'input window, operand 0, single buffered']
    #allocation3 [shape = 's32[1]{0}', space=sflag, size = 0x4, scoped, tag = 'scoped memory for im_layer_forward.1']
    #allocation4 [shape = 's32[1]{0}', space=sflag, size = 0x4, scoped, tag = 'scoped memory for im_layer_forward.1']
    #allocation5 [shape = 'u8[4096]{0}', space=vmem, size = 0x1000, scoped, tag = 'input window, operand 1, single buffered']
    #allocation6 [shape = 's32[1]{0}', space=sflag, size = 0x4, scoped, tag = 'scoped memory for im_layer_forward.1']
    #allocation7 [shape = 'u8[4096]{0}', space=vmem, size = 0x1000, scoped, tag = 'input window, operand 2, single buffered']
    #allocation8 [shape = 'u8[4096]{0}', space=vmem, size = 0x1000, scoped, tag = 'output window, operand 0, single buffered']
    %10 = vsyncpa [#allocation3], 0
    %11 = vsyncpa [#allocation6], 0
    %12 = vsyncpa [#allocation4], 0
    // Predicated region
    $region2: #{im_layer_forward.1} parent=1 // pred_check
      _
    $region3: #{im_layer_forward.1} parent=1 // pred_check_branch
      %14 = sbr.rel (0) target = $region5
    $region4: #{im_layer_forward.1} parent=1 // pred_region
      %s16 = ssub.s32 128, 128
      %17 = vsyncadd [#allocation3], %s16
      %s19 = sshll.u32 [#allocation2], 4
      %s20 = int_to_ptr.vmem [resolvable:$true] %s19
      %22 = dma.hbm_to_vmem [thread:$0]  %s0, 128, %s20, [#allocation3]
    $region5: #{im_layer_forward.1} parent=1 // pred_fallthru
      _
    // Predicated region
    $region6: #{im_layer_forward.1} parent=1 // pred_check
      _
    $region7: #{im_layer_forward.1} parent=1 // pred_check_branch
      %24 = sbr.rel (0) target = $region9
    $region8: #{im_layer_forward.1} parent=1 // pred_region
      %s26 = ssub.s32 128, 128
      %27 = vsyncadd [#allocation6], %s26
      %s29 = sshll.u32 [#allocation5], 4
      %s30 = int_to_ptr.vmem [resolvable:$true] %s29
      %32 = dma.hbm_to_vmem [thread:$0]  %s1, 128, %s30, [#allocation6]
    $region9: #{im_layer_forward.1} parent=1 // pred_fallthru
      _
    // Predicated region
    $region10: #{im_layer_forward.1} parent=1 // pred_check
      _
    $region11: #{im_layer_forward.1} parent=1 // pred_check_branch
      %34 = sbr.rel (0) target = $region13
    $region12: #{im_layer_forward.1} parent=1 // pred_region
      %s36 = ssub.s32 128, 128
      %37 = vsyncadd [#allocation6], %s36
      %s38 = sshll.u32 [#allocation7], 4
      %s39 = int_to_ptr.vmem [resolvable:$true] %s38
      %44 = dma.hbm_to_vmem [thread:$0]  %s2, 128, %s39, [#allocation6], 64, 64, 4
    $region13: #{im_layer_forward.1} parent=1 // pred_fallthru
      _
    // Predicated region
    $region14: #{im_layer_forward.1} parent=1 // pred_check
      _
    $region15: #{im_layer_forward.1} parent=1 // pred_check_branch
      %46 = sbr.rel (0) target = $region17
    $region16: #{im_layer_forward.1} parent=1 // pred_region
      _
    $region17: #{im_layer_forward.1} parent=1 // pred_fallthru
      _
    // Predicated region
    $region18: #{im_layer_forward.1} parent=1 // pred_check
      _
    $region19: #{im_layer_forward.1} parent=1 // pred_check_branch
      %48 = sbr.rel (0) target = $region21
    $region20: #{im_layer_forward.1} parent=1 // pred_region
      _
    $region21: #{im_layer_forward.1} parent=1 // pred_fallthru
      _
    // Predicated region
    $region22: #{im_layer_forward.1} parent=1 // pred_check
      _
    $region23: #{im_layer_forward.1} parent=1 // pred_check_branch
      %50 = sbr.rel (0) target = $region25
    $region24: #{im_layer_forward.1} parent=1 // pred_region
      %51 = dma.done [#allocation3], 128
    $region25: #{im_layer_forward.1} parent=1 // pred_fallthru
      _
    // Predicated region
    $region26: #{im_layer_forward.1} parent=1 // pred_check
      _
    $region27: #{im_layer_forward.1} parent=1 // pred_check_branch
      %53 = sbr.rel (0) target = $region29
    $region28: #{im_layer_forward.1} parent=1 // pred_region
      %54 = dma.done [#allocation6], 128
    $region29: #{im_layer_forward.1} parent=1 // pred_fallthru
      _
    // Predicated region
    $region30: #{im_layer_forward.1} parent=1 // pred_check
      _
    $region31: #{im_layer_forward.1} parent=1 // pred_check_branch
      %56 = sbr.rel (0) target = $region33
    $region32: #{im_layer_forward.1} parent=1 // pred_region
      %57 = dma.done [#allocation6], 128
    $region33: #{im_layer_forward.1} parent=1 // pred_fallthru
      _
    %v59 = vld [vmem:[#allocation2] sm:$0xff]
    %v60 = vpack.c.bf16 %v59, %v59
    %v61 = vld [vmem:[#allocation5] sm:$0xff]
    %v62 = vpack.c.bf16 %v61, %v61
    %v63 = vld [vmem:[#allocation7] sm:$0xf]
    %v64 = vld [vmem:[#allocation7 + $0x4] sm:$0xf]
    %v65 = vld [vmem:[%s3] sm:$0xf]
    %vm66 = vcmask 64512
    %v68 = vsel %vm66, %v62, 0
    %vm70 = vcmask 1043456
    %v72 = vsel %vm70, %v65, 0
    %74 = vmatprep.subr.bf16.mxu0 0
    %75 = vmatpush1.bf16.msra.mxu0 %v72
    %76 = vmatprep.subr.bf16.mxu0 0
    %77 = vmatpush1.bf16.msra.mxu0 0
    %78 = vmatprep.subr.bf16.mxu0 0
    %79 = vmatpush1.bf16.msra.mxu0 0
    %80 = vmatprep.subr.bf16.mxu0 0
    %81 = vmatpush1.bf16.msra.mxu0 0
    %82 = vmatprep.subr.bf16.mxu0 0
    %83 = vmatpush1.bf16.msra.mxu0 0
    %84 = vmatprep.subr.bf16.mxu0 0
    %85 = vmatpush1.bf16.msra.mxu0 0
    %86 = vmatprep.subr.bf16.mxu0 0
    %87 = vmatpush1.bf16.msra.mxu0 0
    %88 = vmatprep.subr.bf16.mxu0 0
    %89 = vmatpush1.bf16.msra.mxu0 0
    %90 = vmatprep.subr.bf16.mxu0 0
    %91 = vmatpush1.bf16.msra.mxu0 0
    %92 = vmatprep.subr.bf16.mxu0 0
    %93 = vmatpush1.bf16.msra.mxu0 0
    %94 = vmatprep.subr.bf16.mxu0 0
    %95 = vmatpush1.bf16.msra.mxu0 0
    %96 = vmatprep.subr.bf16.mxu0 0
    %97 = vmatpush1.bf16.msra.mxu0 0
    %98 = vmatprep.subr.bf16.mxu0 0
    %99 = vmatpush1.bf16.msra.mxu0 0
    %100 = vmatprep.subr.bf16.mxu0 0
    %101 = vmatpush1.bf16.msra.mxu0 0
    %102 = vmatprep.subr.bf16.mxu0 0
    %103 = vmatpush1.bf16.msra.mxu0 0
    %104 = vmatprep.subr.bf16.mxu0 0
    %105 = vmatpush1.bf16.msra.mxu0 0
    %106 = vmatprep.mubr.bf16.mxu0 0
    %107 = vmatmul.mubr.bf16.gmra.mrb[0].mxu0 %v68
    %v108 = vpop.f32.mrb[0].mxu0
    %v109 = vadd.f32 0.0, %v108
    %v110 = vpop.f32.mrb[0].mxu0
    %v111 = vpop.f32.mrb[0].mxu0
    %v112 = vpop.f32.mrb[0].mxu0
    %113 = vdwg.mxu0
    %v116 = vunpack.c.l.b16 %v63
    %v117 = vunpack.c.l.b16 %v64
    %v118 = vpack.c.b16 %v117, %v116
    %vm120 = vcmask 130048
    %v122 = vsel %vm120, %v60, 0
    %124 = vmatprep.subr.bf16.mxu0 0
    %125 = vmatpush1.bf16.msra.mxu0 %v118
    %126 = vmatprep.subr.bf16.mxu0 0
    %127 = vmatpush1.bf16.msra.mxu0 0
    %128 = vmatprep.subr.bf16.mxu0 0
    %129 = vmatpush1.bf16.msra.mxu0 0
    %130 = vmatprep.subr.bf16.mxu0 0
    %131 = vmatpush1.bf16.msra.mxu0 0
    %132 = vmatprep.subr.bf16.mxu0 0
    %133 = vmatpush1.bf16.msra.mxu0 0
    %134 = vmatprep.subr.bf16.mxu0 0
    %135 = vmatpush1.bf16.msra.mxu0 0
    %136 = vmatprep.subr.bf16.mxu0 0
    %137 = vmatpush1.bf16.msra.mxu0 0
    %138 = vmatprep.subr.bf16.mxu0 0
    %139 = vmatpush1.bf16.msra.mxu0 0
    %140 = vmatprep.subr.bf16.mxu0 0
    %141 = vmatpush1.bf16.msra.mxu0 0
    %142 = vmatprep.subr.bf16.mxu0 0
    %143 = vmatpush1.bf16.msra.mxu0 0
    %144 = vmatprep.subr.bf16.mxu0 0
    %145 = vmatpush1.bf16.msra.mxu0 0
    %146 = vmatprep.subr.bf16.mxu0 0
    %147 = vmatpush1.bf16.msra.mxu0 0
    %148 = vmatprep.subr.bf16.mxu0 0
    %149 = vmatpush1.bf16.msra.mxu0 0
    %150 = vmatprep.subr.bf16.mxu0 0
    %151 = vmatpush1.bf16.msra.mxu0 0
    %152 = vmatprep.subr.bf16.mxu0 0
    %153 = vmatpush1.bf16.msra.mxu0 0
    %154 = vmatprep.subr.bf16.mxu0 0
    %155 = vmatpush1.bf16.msra.mxu0 0
    %156 = vmatprep.mubr.bf16.mxu0 0
    %157 = vmatmul.mubr.bf16.gmra.mrb[0].mxu0 %v122
    %v158 = vpop.f32.mrb[0].mxu0
    %v159 = vadd.f32 %v109, %v158
    %v160 = vpop.f32.mrb[0].mxu0
    %v161 = vpop.f32.mrb[0].mxu0
    %v162 = vpop.f32.mrb[0].mxu0
    %163 = vdwg.mxu0
    %v164 = vld [vmem:[%s4] sm:$0x1]
    %v166 = vlaneseq
    %v167 = vshrl.u32 %v166, 7
    %v168 = vsub.s32 0, %v167
    %v169 = vrot.slane %v164, %v168
    %v171 = vadd.f32 %v159, %v169
    %v172 = vxor.u32 %v171, 2147483648
    %v173 = vmul.f32 %v172, 1.442695
    %v174 = vpow.pop %v173
    %v175 = vadd.f32 %v174, 1.0
    %v176 = vrcp.pop %v175
    %v177 = vmul.f32 1.0, %v176
    %178 = vst [vmem:[#allocation8] sm:$0xff] %v177
    // Predicated region
    $region34: #{im_layer_forward.1} parent=1 // pred_check
      _
    $region35: #{im_layer_forward.1} parent=1 // pred_check_branch
      %180 = sbr.rel (0) target = $region37
    $region36: #{im_layer_forward.1} parent=1 // pred_region
      %s182 = ssub.s32 128, 128
      %183 = vsyncadd [#allocation4], %s182
      %s185 = sshll.u32 [#allocation8], 4
      %s186 = int_to_ptr.vmem [resolvable:$true] %s185
      %188 = dma.vmem_to_hbm [thread:$0]  %s186, 128, %s5, [#allocation4]
    $region37: #{im_layer_forward.1} parent=1 // pred_fallthru
      _
    // Predicated region
    $region38: #{im_layer_forward.1} parent=1 // pred_check
      _
    $region39: #{im_layer_forward.1} parent=1 // pred_check_branch
      %190 = sbr.rel (0) target = $region41
    $region40: #{im_layer_forward.1} parent=1 // pred_region
      %191 = dma.done [#allocation4], 128
    $region41: #{im_layer_forward.1} parent=1 // pred_fallthru
      _
    %192 = vsyncpa [#allocation3], 1
    %193 = vsyncpa [#allocation6], 1
    %194 = vsyncpa [#allocation4], 1

</llo_original>
